<compile_context>
chip_gen: v7x
topology: tpu7x:2x2x1
jax: 0.10.0
libtpu: 0.0.40
codegen_flags: <defaults>
</compile_context>

<pallas_src>
import jax
import jax.numpy as jnp
import numpy as np
from jax.experimental import pallas as pl
from jax.experimental.pallas import tpu as pltpu


def _triplet_accuracy_kernel(a_ref, p_ref, n_ref, out_ref):
    a = a_ref[...].astype(jnp.float32)                 # (TM, D)
    p = p_ref[...].astype(jnp.float32)
    n = n_ref[...].astype(jnp.float32)
    dp = a - p
    dn = a - n
    d_pos = jnp.sum(dp * dp, axis=1, keepdims=True)    # (TM, 1)
    d_neg = jnp.sum(dn * dn, axis=1, keepdims=True)    # (TM, 1)
    out_ref[...] = (d_pos < d_neg).astype(jnp.int32)


def triplet_accuracy(anchor, positive, negative, *, block_rows=256):
    """anchor/positive/negative: [B, D] float -> bool [B] (dist_pos < dist_neg)."""
    B, D = anchor.shape
    assert positive.shape == (B, D) and negative.shape == (B, D)
    assert block_rows % 8 == 0, "row tile must be sublane (8) aligned"

    if B <= block_rows:
        tm, b_padded = B, B                      # single full block, no padding
    else:
        tm = block_rows
        b_padded = pl.cdiv(B, tm) * tm           # pad rows; padded rows -> False

    if b_padded != B:
        pad = ((0, b_padded - B), (0, 0))
        anchor = jnp.pad(anchor, pad)
        positive = jnp.pad(positive, pad)
        negative = jnp.pad(negative, pad)

    row_spec = pl.BlockSpec((tm, D), lambda i: (i, 0))
    out = pl.pallas_call(
        _triplet_accuracy_kernel,
        out_shape=jax.ShapeDtypeStruct((b_padded, 1), jnp.int32),
        grid=(b_padded // tm,),
        in_specs=[row_spec, row_spec, row_spec],
        out_specs=pl.BlockSpec((tm, 1), lambda i: (i, 0)),
        compiler_params=pltpu.CompilerParams(
            dimension_semantics=("parallel",)),
    )(anchor, positive, negative)
    return out[:B, 0].astype(jnp.bool_)


def _reference(anchor, positive, negative):
    a = np.asarray(anchor, dtype=np.float64)
    p = np.asarray(positive, dtype=np.float64)
    n = np.asarray(negative, dtype=np.float64)
    d_pos = ((a - p) ** 2).sum(1)
    d_neg = ((a - n) ** 2).sum(1)
    return d_pos < d_neg


if __name__ == "__main__":
    key = jax.random.PRNGKey(0)
    k1, k2, k3, k4, k5, k6 = jax.random.split(key, 6)

    # Case 1: small batch, single full block (matches the module's typical use).
    B, D = 8, 32
    anchor = jax.random.normal(k1, (B, D), dtype=jnp.float32)
    positive = jax.random.normal(k2, (B, D), dtype=jnp.float32)
    negative = jax.random.normal(k3, (B, D), dtype=jnp.float32)
    out = jax.block_until_ready(triplet_accuracy(anchor, positive, negative))
    assert out.shape == (B,) and out.dtype == jnp.bool_
    np.testing.assert_array_equal(np.asarray(out), _reference(anchor, positive, negative))

    # Case 2: tiled + padded path (grid of row tiles, megacore-parallel axis).
    B2, D2 = 500, 64
    a2 = jax.random.normal(k4, (B2, D2), dtype=jnp.float32)
    p2 = jax.random.normal(k5, (B2, D2), dtype=jnp.float32)
    n2 = jax.random.normal(k6, (B2, D2), dtype=jnp.float32)
    out2 = jax.block_until_ready(triplet_accuracy(a2, p2, n2, block_rows=128))
    np.testing.assert_array_equal(np.asarray(out2), _reference(a2, p2, n2))

    print("KERNEL_OK")
</pallas_src>

<mosaic_0001>
module attributes {stable_mosaic.version = 11 : i64} {
  func.func @_triplet_accuracy_kernel(%arg0: i32, %arg1: memref<8x32xf32, #tpu.memory_space<vmem>>, %arg2: memref<8x32xf32, #tpu.memory_space<vmem>>, %arg3: memref<8x32xf32, #tpu.memory_space<vmem>>, %arg4: memref<8x1xi32, #tpu.memory_space<vmem>>) attributes {dimension_semantics = [#tpu.dimension_semantics<parallel>], iteration_bounds = array<i64: 1>, scalar_prefetch = 0 : i64, scratch_operands = 0 : i64, tpu.core_type = #tpu.core_type<tc>, window_params = [{transform_indices = @transform_0, window_bounds = array<i64: 8, 32>}, {transform_indices = @transform_1, window_bounds = array<i64: 8, 32>}, {transform_indices = @transform_2, window_bounds = array<i64: 8, 32>}, {transform_indices = @transform_3, window_bounds = array<i64: 8, 1>}]} {
    %c0 = arith.constant 0 : index
    %c0_0 = arith.constant 0 : index
    %0 = vector.load %arg1[%c0, %c0_0] : memref<8x32xf32, #tpu.memory_space<vmem>>, vector<8x32xf32>
    %c0_1 = arith.constant 0 : index
    %c0_2 = arith.constant 0 : index
    %1 = vector.load %arg2[%c0_1, %c0_2] : memref<8x32xf32, #tpu.memory_space<vmem>>, vector<8x32xf32>
    %c0_3 = arith.constant 0 : index
    %c0_4 = arith.constant 0 : index
    %2 = vector.load %arg3[%c0_3, %c0_4] : memref<8x32xf32, #tpu.memory_space<vmem>>, vector<8x32xf32>
    %3 = arith.subf %0, %1 : vector<8x32xf32>
    %4 = arith.subf %0, %2 : vector<8x32xf32>
    %5 = arith.mulf %3, %3 : vector<8x32xf32>
    %cst = arith.constant dense<0.000000e+00> : vector<8xf32>
    %6 = vector.multi_reduction <add>, %5, %cst [1] : vector<8x32xf32> to vector<8xf32>
    %7 = vector.shape_cast %6 : vector<8xf32> to vector<8x1xf32>
    %8 = arith.mulf %4, %4 : vector<8x32xf32>
    %cst_5 = arith.constant dense<0.000000e+00> : vector<8xf32>
    %9 = vector.multi_reduction <add>, %8, %cst_5 [1] : vector<8x32xf32> to vector<8xf32>
    %10 = vector.shape_cast %9 : vector<8xf32> to vector<8x1xf32>
    %11 = arith.cmpf olt, %7, %10 : vector<8x1xf32>
    %12 = arith.extui %11 : vector<8x1xi1> to vector<8x1xi32>
    %c0_6 = arith.constant 0 : index
    %c0_7 = arith.constant 0 : index
    %13 = vector.load %arg4[%c0_6, %c0_7] : memref<8x1xi32, #tpu.memory_space<vmem>>, vector<8x1xi32>
    tpu.vector_store %arg4[%c0_6, %c0_7], %12 {strides = array<i32>} : memref<8x1xi32, #tpu.memory_space<vmem>>, vector<8x1xi32>,
    return
  }
  func.func @transform_0(%arg0: i32) -> (i32, i32) {
    %c0_i32 = arith.constant 0 : i32
    %c0_i32_0 = arith.constant 0 : i32
    return %arg0, %c0_i32 : i32, i32
  }
  func.func @transform_1(%arg0: i32) -> (i32, i32) {
    %c0_i32 = arith.constant 0 : i32
    %c0_i32_0 = arith.constant 0 : i32
    return %arg0, %c0_i32 : i32, i32
  }
  func.func @transform_2(%arg0: i32) -> (i32, i32) {
    %c0_i32 = arith.constant 0 : i32
    %c0_i32_0 = arith.constant 0 : i32
    return %arg0, %c0_i32 : i32, i32
  }
  func.func @transform_3(%arg0: i32) -> (i32, i32) {
    %c0_i32 = arith.constant 0 : i32
    %c0_i32_0 = arith.constant 0 : i32
    return %arg0, %c0_i32 : i32, i32
  }
}

</mosaic_0001>

<llo_original>
// kernel: tpu_custom_call.1
$region0: #{tpu_custom_call.1}
  #allocation0 [shape = 'u32[]', space=smem, size = 0x4, offset = 0x4, fixed_abs, tag = 'smem constant byte address 0x4 - core index']
  #allocation1 [shape = 'u32[144,128]{1,0:T(1,128)}', space=vmem, size = 0x12000, scoped, tag = 'internal scratch']
  %s0 = inlined_call_operand.hbm [shape: f32[8,32], index: 0, kind: input, shape index: {}]
  %s1 = inlined_call_operand.hbm [shape: f32[8,32], index: 1, kind: input, shape index: {}]
  %s2 = inlined_call_operand.hbm [shape: f32[8,32], index: 2, kind: input, shape index: {}]
  %s3 = inlined_call_operand.vmem [shape: s32[8,1], index: 3, kind: output, shape index: {}]
  %s4 = sld [smem:[#allocation0]]
  $region34: #{tpu_custom_call.1} parent=0
    _
  %s6 = ssub.s32 1, %s4
  %s7 = scalar_select 0, %s6, %s4
  $region1: #{tpu_custom_call.1} parent=0
    #allocation2 [shape = 'u8[4096]{0}', space=vmem, size = 0x1000, scoped, tag = 'input window, operand 0, single buffered']
    #allocation3 [shape = 's32[1]{0}', space=sflag, size = 0x4, scoped, tag = 'scoped memory for tpu_custom_call.1']
    #allocation4 [shape = 'u8[4096]{0}', space=vmem, size = 0x1000, scoped, tag = 'input window, operand 1, single buffered']
    #allocation5 [shape = 's32[1]{0}', space=sflag, size = 0x4, scoped, tag = 'scoped memory for tpu_custom_call.1']
    #allocation6 [shape = 'u8[4096]{0}', space=vmem, size = 0x1000, scoped, tag = 'input window, operand 2, single buffered']
    %8 = vsyncpa [#allocation3], 0
    %9 = vsyncpa [#allocation5], 0
    // Predicated region
    $region2: #{tpu_custom_call.1} parent=1 // pred_check
      _
    $region3: #{tpu_custom_call.1} parent=1 // pred_check_branch
      %11 = sbr.rel (0) target = $region5
    $region4: #{tpu_custom_call.1} parent=1 // pred_region
      %s13 = ssub.s32 128, 128
      %14 = vsyncadd [#allocation3], %s13
      %s16 = sshll.u32 [#allocation2], 4
      %s17 = int_to_ptr.vmem [resolvable:$true] %s16
      %19 = dma.hbm_to_vmem [thread:$0]  %s0, 128, %s17, [#allocation3]
    $region5: #{tpu_custom_call.1} parent=1 // pred_fallthru
      _
    // Predicated region
    $region6: #{tpu_custom_call.1} parent=1 // pred_check
      _
    $region7: #{tpu_custom_call.1} parent=1 // pred_check_branch
      %21 = sbr.rel (0) target = $region9
    $region8: #{tpu_custom_call.1} parent=1 // pred_region
      %s23 = ssub.s32 128, 128
      %24 = vsyncadd [#allocation5], %s23
      %s26 = sshll.u32 [#allocation4], 4
      %s27 = int_to_ptr.vmem [resolvable:$true] %s26
      %29 = dma.hbm_to_vmem [thread:$0]  %s1, 128, %s27, [#allocation5]
    $region9: #{tpu_custom_call.1} parent=1 // pred_fallthru
      _
    // Predicated region
    $region10: #{tpu_custom_call.1} parent=1 // pred_check
      _
    $region11: #{tpu_custom_call.1} parent=1 // pred_check_branch
      %31 = sbr.rel (0) target = $region13
    $region12: #{tpu_custom_call.1} parent=1 // pred_region
      %s33 = ssub.s32 128, 128
      %34 = vsyncadd [#allocation5], %s33
      %s36 = sshll.u32 [#allocation6], 4
      %s37 = int_to_ptr.vmem [resolvable:$true] %s36
      %39 = dma.hbm_to_vmem [thread:$0]  %s2, 128, %s37, [#allocation5]
    $region13: #{tpu_custom_call.1} parent=1 // pred_fallthru
      _
    // Predicated region
    $region14: #{tpu_custom_call.1} parent=1 // pred_check
      _
    $region15: #{tpu_custom_call.1} parent=1 // pred_check_branch
      %41 = sbr.rel (0) target = $region17
    $region16: #{tpu_custom_call.1} parent=1 // pred_region
      %42 = dma.done [#allocation3], 128
    $region17: #{tpu_custom_call.1} parent=1 // pred_fallthru
      _
    // Predicated region
    $region18: #{tpu_custom_call.1} parent=1 // pred_check
      _
    $region19: #{tpu_custom_call.1} parent=1 // pred_check_branch
      %44 = sbr.rel (0) target = $region21
    $region20: #{tpu_custom_call.1} parent=1 // pred_region
      %45 = dma.done [#allocation5], 128
    $region21: #{tpu_custom_call.1} parent=1 // pred_fallthru
      _
    // Predicated region
    $region22: #{tpu_custom_call.1} parent=1 // pred_check
      _
    $region23: #{tpu_custom_call.1} parent=1 // pred_check_branch
      %47 = sbr.rel (0) target = $region25
    $region24: #{tpu_custom_call.1} parent=1 // pred_region
      %48 = dma.done [#allocation5], 128
    $region25: #{tpu_custom_call.1} parent=1 // pred_fallthru
      _
    %v49 = vld [vmem:[#allocation2] sm:$0xff]
    %v50 = vld [vmem:[#allocation4] sm:$0xff]
    %v51 = vld [vmem:[#allocation6] sm:$0xff]
    %v52 = vsub.f32 %v49, %v50
    %v53 = vsub.f32 %v49, %v51
    %v54 = vmul.f32 %v52, %v52
    %vm55 = vcmask 261120
    %v56 = vsel %vm55, %v54, 0.0
    %57 = vadd.xlane.f32.xlu0 %v56
    %v58 = vpop.xlane.xlu0 %57
    %v59 = vmul.f32 %v53, %v53
    %v60 = vsel %vm55, %v59, 0.0
    %61 = vadd.xlane.f32.xlu0 %v60
    %v62 = vpop.xlane.xlu0 %61
    %vm63 = vcmp.lt.f32.partialorder %v58, %v62
    %v64 = vsel %vm63, 1, 0
    %vm65 = vcmask 7168
    %66 = vst.msk [vmem:[%s3] sm:$0xff] %vm65, %v64
    // Predicated region
    $region26: #{tpu_custom_call.1} parent=1 // pred_check
      _
    $region27: #{tpu_custom_call.1} parent=1 // pred_check_branch
      %68 = sbr.rel (0) target = $region29
    $region28: #{tpu_custom_call.1} parent=1 // pred_region
      _
    $region29: #{tpu_custom_call.1} parent=1 // pred_fallthru
      _
    // Predicated region
    $region30: #{tpu_custom_call.1} parent=1 // pred_check
      _
    $region31: #{tpu_custom_call.1} parent=1 // pred_check_branch
      %70 = sbr.rel (0) target = $region33
    $region32: #{tpu_custom_call.1} parent=1 // pred_region
      _
    $region33: #{tpu_custom_call.1} parent=1 // pred_fallthru
      _
    %71 = vsyncpa [#allocation3], 1
    %72 = vsyncpa [#allocation5], 1

</llo_original>
